<compile_context>
chip_gen: v5e
topology: v5e:2x2
jax: 0.10.0
libtpu: 0.0.40
codegen_flags: <defaults>
</compile_context>

<pallas_src>
import jax
import jax.numpy as jnp
from jax.experimental import pallas as pl
from jax.experimental.pallas import tpu as pltpu

HIDDEN = 768          # BERT-base hidden size
N_CLASSES = 6         # classifier output
N_PAD = 128           # pad class dim to one full lane register (lane-dense output)
SUBLANES = 8          # pad output rows to a full sublane group (unmasked vst)
VOCAB = 64            # synthetic vocab for the stand-in embedding
SEQ = 8
BATCH = 2
NEG_INF = -1e30


def cls_head_kernel(toks_ref, x_ref, w_ref, b_ref, o_ref):
    """probs = softmax(x @ W + b) over the first N_CLASSES lanes.

    toks_ref : (R,) int32 SMEM  — scalar prefetch; consumed only by the
               embedding-row gather index_map, unused in the body.
    x_ref    : (1, 1, HIDDEN) bf16 VMEM — embedding row of this request's CLS token
               (stand-in for last_hidden_state[0][0]).
    w_ref    : (HIDDEN, N_PAD) bf16 VMEM — pre-transposed, lane-padded Linear weight.
               INVARIANT: columns [N_CLASSES:] are exactly zero (bias-as-mask).
    b_ref    : (1, N_PAD) f32 VMEM — lane-padded bias; padded lanes hold NEG_INF,
               which masks them out of the softmax with no extra VPU ops.
    o_ref    : (1, SUBLANES, N_PAD) f32 VMEM — all sublanes hold identical probs;
               row 0, lanes [:N_CLASSES] are the result.
    """
    del toks_ref
    x = x_ref[0]                                              # (1, HIDDEN) bf16
    # M=1 matmul (K-bound on the MXU); softmax also stays at M=1.
    logits = jnp.dot(x, w_ref[...],
                     preferred_element_type=jnp.float32) + b_ref[...]   # (1, N_PAD) f32
    m = jnp.max(logits, axis=-1, keepdims=True)
    e = jnp.exp(logits - m)                                   # padded lanes: exp(-1e30)=0
    s = jnp.sum(e, axis=-1, keepdims=True)
    probs = e * pl.reciprocal(s, approx=True)                 # divide via EUP
    # Broadcast only at the final store so the vst is full-sublane / unmasked.
    o_ref[...] = jnp.broadcast_to(probs, (1, SUBLANES, N_PAD))


def init_params(key):
    k1, k2, k3 = jax.random.split(key, 3)
    emb_table = jax.random.normal(k1, (VOCAB, HIDDEN), jnp.float32) * 0.02
    # nn.Linear(768, 6): weight (6, 768), bias (6,) — deterministic synthetic init.
    bound = 1.0 / (HIDDEN ** 0.5)
    w = jax.random.uniform(k2, (N_CLASSES, HIDDEN), jnp.float32, -bound, bound)
    b = jax.random.uniform(k3, (N_CLASSES,), jnp.float32, -bound, bound)

    # ---- One-time kernel-layout prep (hoisted out of the forward path) ----
    #  * embedding stored in bf16, reshaped to (VOCAB, 1, HIDDEN) so one row is
    #    gathered with a full-(1, HIDDEN)-block DMA keyed on the prefetched token id.
    #  * weight transposed + lane-padded in bf16.  INVARIANT: padded columns
    #    [:, N_CLASSES:] are exactly zero — the bias-as-mask trick relies on it.
    #  * bias lane-padded in f32 with NEG_INF in padded lanes (bias-as-mask), so the
    #    kernel needs no iota/compare/where.
    w_pad = (jnp.zeros((HIDDEN, N_PAD), jnp.bfloat16)
             .at[:, :N_CLASSES].set(w.T.astype(jnp.bfloat16)))
    b_pad = (jnp.full((1, N_PAD), NEG_INF, jnp.float32)
             .at[0, :N_CLASSES].set(b))

    return {
        "emb_table": emb_table.astype(jnp.bfloat16).reshape(VOCAB, 1, HIDDEN),
        "w": w, "b": b,                  # original Linear params (reference calc)
        "w_pad": w_pad, "b_pad": b_pad,  # kernel-ready layouts
    }


def cls_head_batched(tokens, params):
    """Classifier head for R requests in one pallas_call -> (R, N_CLASSES) probs.

    Weight / bias index_maps are constant, so those blocks stay VMEM-resident across
    the grid; only the 1.5 KB embedding row is fetched per request.  The request axis
    is 'parallel' so v7x shards it across both TensorCores; launch + weight-DMA cost
    is amortized over R (the change that actually moves wall-clock).
    """
    R = tokens.shape[0]
    out = pl.pallas_call(
        cls_head_kernel,
        out_shape=jax.ShapeDtypeStruct((R, SUBLANES, N_PAD), jnp.float32),
        grid_spec=pltpu.PrefetchScalarGridSpec(
            num_scalar_prefetch=1,          # token ids -> SMEM, drive the row gather
            grid=(R,),
            in_specs=[
                # embedding-row gather: block index = token id from prefetched ids
                pl.BlockSpec((1, 1, HIDDEN), lambda r, toks: (toks[r], 0, 0),
                             memory_space=pltpu.MemorySpace.VMEM),
                pl.BlockSpec((HIDDEN, N_PAD), lambda r, toks: (0, 0),
                             memory_space=pltpu.MemorySpace.VMEM),
                pl.BlockSpec((1, N_PAD), lambda r, toks: (0, 0),
                             memory_space=pltpu.MemorySpace.VMEM),
            ],
            out_specs=pl.BlockSpec((1, SUBLANES, N_PAD), lambda r, toks: (r, 0, 0),
                                   memory_space=pltpu.MemorySpace.VMEM),
        ),
        compiler_params=pltpu.CompilerParams(dimension_semantics=("parallel",)),
    )(tokens, params["emb_table"], params["w_pad"], params["b_pad"])
    return out[:, 0, :N_CLASSES]


def custom_model_forward(input_ids, params):
    """Mirrors CustomModel.forward(input_ids) -> (6,) probabilities."""
    # TODO(synk): the pretrained 'neuralmind/bert-base-portuguese-cased' backbone has
    # no Pallas equivalent without a checkpoint; a deterministic synthetic embedding
    # lookup stands in for last_hidden_state[0][0]. With a real backbone this
    # ~0.2 MFLOP head should be fused into the backbone's final kernel instead of
    # paying a standalone pallas_call.
    #
    # Prefetch only the scalar actually used: input_ids[0, 0] as a (1,) int32 array.
    tok = input_ids[0, 0].reshape(1).astype(jnp.int32)
    return cls_head_batched(tok, params)[0]


if __name__ == "__main__":
    key = jax.random.PRNGKey(0)
    params = init_params(key)

    # input_ids: (batch=2, seq=8) int32 token ids, as the PyTorch forward expects.
    input_ids = jax.random.randint(jax.random.PRNGKey(1), (BATCH, SEQ), 0, VOCAB,
                                   dtype=jnp.int32)

    probs = jax.jit(custom_model_forward)(input_ids, params)
    probs = jax.block_until_ready(probs)

    # Pure-JAX f32 reference on what the kernel sees (bf16 embedding, f32 Linear).
    emb_f32 = params["emb_table"].reshape(VOCAB, HIDDEN).astype(jnp.float32)

    def ref_head(tok):
        h = emb_f32[tok]
        return jax.nn.softmax(h @ params["w"].T + params["b"], axis=0)

    ref_probs = ref_head(input_ids[0, 0])
    assert probs.shape == (N_CLASSES,)
    assert abs(float(jnp.sum(probs)) - 1.0) < 5e-3, "softmax must sum to ~1"
    assert jnp.allclose(probs, ref_probs, atol=2e-2), "mismatch vs f32 reference"

    # Batched path: amortize launch + weight DMA over several requests.
    tokens = jax.random.randint(jax.random.PRNGKey(2), (4,), 0, VOCAB, dtype=jnp.int32)
    batched = jax.block_until_ready(jax.jit(cls_head_batched)(tokens, params))
    ref_batched = jax.vmap(ref_head)(tokens)
    assert batched.shape == (4, N_CLASSES)
    assert jnp.allclose(batched, ref_batched, atol=2e-2), "batched mismatch"

    print("KERNEL_OK")
</pallas_src>

<mosaic_0001>
module attributes {stable_mosaic.version = 11 : i64} {
  func.func @cls_head_kernel(%arg0: i32, %arg1: memref<1xi32, #tpu.memory_space<smem>>, %arg2: memref<1x1x768xbf16, #tpu.memory_space<vmem>>, %arg3: memref<768x128xbf16, #tpu.memory_space<vmem>>, %arg4: memref<1x128xf32, #tpu.memory_space<vmem>>, %arg5: memref<1x8x128xf32, #tpu.memory_space<vmem>>) attributes {dimension_semantics = [#tpu.dimension_semantics<parallel>], iteration_bounds = array<i64: 1>, scalar_prefetch = 1 : i64, scratch_operands = 0 : i64, tpu.core_type = #tpu.core_type<tc>, window_params = [{transform_indices = @transform_0, window_bounds = array<i64: 1, 1, 768>}, {pipeline_mode = #tpu.pipeline_mode<synchronous>, transform_indices = @transform_1, window_bounds = array<i64: 768, 128>}, {pipeline_mode = #tpu.pipeline_mode<synchronous>, transform_indices = @transform_2, window_bounds = array<i64: 1, 128>}, {transform_indices = @transform_3, window_bounds = array<i64: 1, 8, 128>}]} {
    %c0 = arith.constant 0 : index
    %c0_0 = arith.constant 0 : index
    %c0_1 = arith.constant 0 : index
    %0 = vector.load %arg2[%c0, %c0_0, %c0_1] : memref<1x1x768xbf16, #tpu.memory_space<vmem>>, vector<1x1x768xbf16>
    %1 = vector.shape_cast %0 : vector<1x1x768xbf16> to vector<1x768xbf16>
    %c0_2 = arith.constant 0 : index
    %c0_3 = arith.constant 0 : index
    %2 = vector.load %arg3[%c0_2, %c0_3] : memref<768x128xbf16, #tpu.memory_space<vmem>>, vector<768x128xbf16>
    %cst = arith.constant dense<0.000000e+00> : vector<1x128xf32>
    %3 = tpu.matmul %1, %2, %cst {dimension_numbers = #tpu.dot_dimension_numbers<[1], [0], [0], [1], [0, 0, 1, 1], [], []>} : vector<1x768xbf16>, vector<768x128xbf16>, vector<1x128xf32> -> vector<1x128xf32>
    %c0_4 = arith.constant 0 : index
    %c0_5 = arith.constant 0 : index
    %4 = vector.load %arg4[%c0_4, %c0_5] : memref<1x128xf32, #tpu.memory_space<vmem>>, vector<1x128xf32>
    %5 = arith.addf %3, %4 : vector<1x128xf32>
    %cst_6 = arith.constant dense<0xFF800000> : vector<1xf32>
    %6 = vector.multi_reduction <maximumf>, %5, %cst_6 [1] : vector<1x128xf32> to vector<1xf32>
    %7 = vector.shape_cast %6 : vector<1xf32> to vector<1x1xf32>
    %8 = vector.broadcast %7 : vector<1x1xf32> to vector<1x128xf32>
    %9 = arith.subf %5, %8 : vector<1x128xf32>
    %10 = math.exp %9 : vector<1x128xf32>
    %cst_7 = arith.constant dense<0.000000e+00> : vector<1xf32>
    %11 = vector.multi_reduction <add>, %10, %cst_7 [1] : vector<1x128xf32> to vector<1xf32>
    %12 = vector.shape_cast %11 : vector<1xf32> to vector<1x1xf32>
    %13 = tpu.reciprocal %12 {approx = true} : vector<1x1xf32> -> vector<1x1xf32>
    %14 = vector.broadcast %13 : vector<1x1xf32> to vector<1x128xf32>
    %15 = arith.mulf %10, %14 : vector<1x128xf32>
    %16 = vector.shape_cast %15 : vector<1x128xf32> to vector<1x1x128xf32>
    %17 = vector.broadcast %16 : vector<1x1x128xf32> to vector<1x8x128xf32>
    %c0_8 = arith.constant 0 : index
    %c0_9 = arith.constant 0 : index
    %c0_10 = arith.constant 0 : index
    %18 = vector.load %arg5[%c0_8, %c0_9, %c0_10] : memref<1x8x128xf32, #tpu.memory_space<vmem>>, vector<1x8x128xf32>
    tpu.vector_store %arg5[%c0_8, %c0_9, %c0_10], %17 {strides = array<i32>} : memref<1x8x128xf32, #tpu.memory_space<vmem>>, vector<1x8x128xf32>,
    return
  }
  func.func @transform_0(%arg0: i32, %arg1: memref<1xi32, #tpu.memory_space<smem>>) -> (i32, i32, i32) {
    %0 = arith.index_cast %arg0 : i32 to index
    %1 = memref.load %arg1[%0] : memref<1xi32, #tpu.memory_space<smem>>
    %c0_i32 = arith.constant 0 : i32
    %c0_i32_0 = arith.constant 0 : i32
    %c0_i32_1 = arith.constant 0 : i32
    return %1, %c0_i32, %c0_i32_0 : i32, i32, i32
  }
  func.func @transform_1(%arg0: i32, %arg1: memref<1xi32, #tpu.memory_space<smem>>) -> (i32, i32) {
    %c0_i32 = arith.constant 0 : i32
    %c0_i32_0 = arith.constant 0 : i32
    %c0_i32_1 = arith.constant 0 : i32
    return %c0_i32, %c0_i32_0 : i32, i32
  }
  func.func @transform_2(%arg0: i32, %arg1: memref<1xi32, #tpu.memory_space<smem>>) -> (i32, i32) {
    %c0_i32 = arith.constant 0 : i32
    %c0_i32_0 = arith.constant 0 : i32
    %c0_i32_1 = arith.constant 0 : i32
    return %c0_i32, %c0_i32_0 : i32, i32
  }
  func.func @transform_3(%arg0: i32, %arg1: memref<1xi32, #tpu.memory_space<smem>>) -> (i32, i32, i32) {
    %c0_i32 = arith.constant 0 : i32
    %c0_i32_0 = arith.constant 0 : i32
    %c0_i32_1 = arith.constant 0 : i32
    return %arg0, %c0_i32, %c0_i32_0 : i32, i32, i32
  }
}

</mosaic_0001>

<llo_original>
// kernel: custom_model_forward.1
$region0: #{custom_model_forward.1}
  #allocation0 [shape = 'u32[]', space=smem, size = 0x4, offset = 0x4, fixed_abs, tag = 'smem constant byte address 0x4 - core index']
  #allocation1 [shape = 'u32[72,128]{1,0:T(1,128)}', space=vmem, size = 0x9000, scoped, tag = 'internal scratch']
  #allocation2 [shape = 's32[1]{0}', space=sflag, size = 0x4, scoped, tag = 'scoped memory for custom_model_forward.1']
  #allocation3 [shape = 's32[1]{0:T(128)S(6)}', space=smem, size = 0x200, scoped, tag = 'prefetched SMEM operand 0']
  %s0 = inlined_call_operand.<no memory space> [shape: s32[1], index: 0, kind: input, shape index: {}]
  %s1 = inlined_call_operand.vmem [shape: bf16[64,1,768], index: 1, kind: input, shape index: {}]
  %s2 = inlined_call_operand.vmem [shape: bf16[768,128], index: 2, kind: input, shape index: {}]
  %s3 = inlined_call_operand.vmem [shape: f32[1,128], index: 3, kind: input, shape index: {}]
  %s4 = inlined_call_operand.vmem [shape: f32[1,8,128], index: 4, kind: output, shape index: {}]
  %s5 = sld [smem:[#allocation0]]
  $region22: #{custom_model_forward.1} parent=0
    _
  %s7 = ssub.s32 1, %s5
  %s8 = scalar_select 0, %s7, %s5
  %9 = sst [smem:[#allocation3]] %s0
  // Predicated region
  $region2: #{custom_model_forward.1} parent=0 // pred_check
    _
  $region3: #{custom_model_forward.1} parent=0 // pred_check_branch
    %11 = sbr.rel (0) target = $region5
  $region4: #{custom_model_forward.1} parent=0 // pred_region
    %s12 = sld [smem:[#allocation3]]
    %p13 = scmp.lt.s32.totalorder %s12, 63
    %s14 = scalar_select %p13, %s12, 63
    %s15 = smul.addr %s14, 6
    %s16 = scalar_lea.vmem %s1, %s15
    %s17 = sld [smem:[#allocation3]]
  $region5: #{custom_model_forward.1} parent=0 // pred_fallthru
    _
  // Predicated region
  $region6: #{custom_model_forward.1} parent=0 // pred_check
    _
  $region7: #{custom_model_forward.1} parent=0 // pred_check_branch
    %19 = sbr.rel (0) target = $region9
  $region8: #{custom_model_forward.1} parent=0 // pred_region
    _
  $region9: #{custom_model_forward.1} parent=0 // pred_fallthru
    _
  // Predicated region
  $region10: #{custom_model_forward.1} parent=0 // pred_check
    _
  $region11: #{custom_model_forward.1} parent=0 // pred_check_branch
    %21 = sbr.rel (0) target = $region13
  $region12: #{custom_model_forward.1} parent=0 // pred_region
    _
  $region13: #{custom_model_forward.1} parent=0 // pred_fallthru
    _
  %s22 = sld [smem:[#allocation3]]
  %p23 = scmp.lt.s32.totalorder %s22, 63
  %s24 = scalar_select %p23, %s22, 63
  %s25 = smul.addr %s24, 6
  %s26 = scalar_lea.vmem %s1, %s25
  %s27 = sld [smem:[#allocation3]]
  %p28 = scmp.lt.s32.totalorder %s27, 63
  %s29 = scalar_select %p28, %s27, 63
  %s30 = smul.addr %s29, 6
  %s31 = scalar_lea.vmem %s1, %s30
  %s32 = sld [smem:[#allocation3]]
  %v33 = vld [vmem:[%s31] sm:$0x3f]
  %v34 = vld [vmem:[%s2] sm:$0xf]
  %v35 = vld [vmem:[%s2 + $0x4] sm:$0xf]
  %v36 = vld [vmem:[%s2 + $0x8] sm:$0xf]
  %v37 = vld [vmem:[%s2 + $0xc] sm:$0xf]
  %v38 = vld [vmem:[%s2 + $0x10] sm:$0xf]
  %v39 = vld [vmem:[%s2 + $0x14] sm:$0xf]
  %v40 = vld [vmem:[%s2 + $0x18] sm:$0xf]
  %v41 = vld [vmem:[%s2 + $0x1c] sm:$0xf]
  %v42 = vld [vmem:[%s2 + $0x20] sm:$0xf]
  %v43 = vld [vmem:[%s2 + $0x24] sm:$0xf]
  %v44 = vld [vmem:[%s2 + $0x28] sm:$0xf]
  %v45 = vld [vmem:[%s2 + $0x2c] sm:$0xf]
  %v46 = vld [vmem:[%s2 + $0x30] sm:$0xf]
  %v47 = vld [vmem:[%s2 + $0x34] sm:$0xf]
  %v48 = vld [vmem:[%s2 + $0x38] sm:$0xf]
  %v49 = vld [vmem:[%s2 + $0x3c] sm:$0xf]
  %v50 = vld [vmem:[%s2 + $0x40] sm:$0xf]
  %v51 = vld [vmem:[%s2 + $0x44] sm:$0xf]
  %v52 = vld [vmem:[%s2 + $0x48] sm:$0xf]
  %v53 = vld [vmem:[%s2 + $0x4c] sm:$0xf]
  %v54 = vld [vmem:[%s2 + $0x50] sm:$0xf]
  %v55 = vld [vmem:[%s2 + $0x54] sm:$0xf]
  %v56 = vld [vmem:[%s2 + $0x58] sm:$0xf]
  %v57 = vld [vmem:[%s2 + $0x5c] sm:$0xf]
  %v58 = vld [vmem:[%s2 + $0x60] sm:$0xf]
  %v59 = vld [vmem:[%s2 + $0x64] sm:$0xf]
  %v60 = vld [vmem:[%s2 + $0x68] sm:$0xf]
  %v61 = vld [vmem:[%s2 + $0x6c] sm:$0xf]
  %v62 = vld [vmem:[%s2 + $0x70] sm:$0xf]
  %v63 = vld [vmem:[%s2 + $0x74] sm:$0xf]
  %v64 = vld [vmem:[%s2 + $0x78] sm:$0xf]
  %v65 = vld [vmem:[%s2 + $0x7c] sm:$0xf]
  %v66 = vld [vmem:[%s2 + $0x80] sm:$0xf]
  %v67 = vld [vmem:[%s2 + $0x84] sm:$0xf]
  %v68 = vld [vmem:[%s2 + $0x88] sm:$0xf]
  %v69 = vld [vmem:[%s2 + $0x8c] sm:$0xf]
  %v70 = vld [vmem:[%s2 + $0x90] sm:$0xf]
  %v71 = vld [vmem:[%s2 + $0x94] sm:$0xf]
  %v72 = vld [vmem:[%s2 + $0x98] sm:$0xf]
  %v73 = vld [vmem:[%s2 + $0x9c] sm:$0xf]
  %v74 = vld [vmem:[%s2 + $0xa0] sm:$0xf]
  %v75 = vld [vmem:[%s2 + $0xa4] sm:$0xf]
  %v76 = vld [vmem:[%s2 + $0xa8] sm:$0xf]
  %v77 = vld [vmem:[%s2 + $0xac] sm:$0xf]
  %v78 = vld [vmem:[%s2 + $0xb0] sm:$0xf]
  %v79 = vld [vmem:[%s2 + $0xb4] sm:$0xf]
  %v80 = vld [vmem:[%s2 + $0xb8] sm:$0xf]
  %v81 = vld [vmem:[%s2 + $0xbc] sm:$0xf]
  %v82 = vld [vmem:[%s2 + $0xc0] sm:$0xf]
  %v83 = vld [vmem:[%s2 + $0xc4] sm:$0xf]
  %v84 = vld [vmem:[%s2 + $0xc8] sm:$0xf]
  %v85 = vld [vmem:[%s2 + $0xcc] sm:$0xf]
  %v86 = vld [vmem:[%s2 + $0xd0] sm:$0xf]
  %v87 = vld [vmem:[%s2 + $0xd4] sm:$0xf]
  %v88 = vld [vmem:[%s2 + $0xd8] sm:$0xf]
  %v89 = vld [vmem:[%s2 + $0xdc] sm:$0xf]
  %v90 = vld [vmem:[%s2 + $0xe0] sm:$0xf]
  %v91 = vld [vmem:[%s2 + $0xe4] sm:$0xf]
  %v92 = vld [vmem:[%s2 + $0xe8] sm:$0xf]
  %v93 = vld [vmem:[%s2 + $0xec] sm:$0xf]
  %v94 = vld [vmem:[%s2 + $0xf0] sm:$0xf]
  %v95 = vld [vmem:[%s2 + $0xf4] sm:$0xf]
  %v96 = vld [vmem:[%s2 + $0xf8] sm:$0xf]
  %v97 = vld [vmem:[%s2 + $0xfc] sm:$0xf]
  %v98 = vld [vmem:[%s2 + $0x100] sm:$0xf]
  %v99 = vld [vmem:[%s2 + $0x104] sm:$0xf]
  %v100 = vld [vmem:[%s2 + $0x108] sm:$0xf]
  %v101 = vld [vmem:[%s2 + $0x10c] sm:$0xf]
  %v102 = vld [vmem:[%s2 + $0x110] sm:$0xf]
  %v103 = vld [vmem:[%s2 + $0x114] sm:$0xf]
  %v104 = vld [vmem:[%s2 + $0x118] sm:$0xf]
  %v105 = vld [vmem:[%s2 + $0x11c] sm:$0xf]
  %v106 = vld [vmem:[%s2 + $0x120] sm:$0xf]
  %v107 = vld [vmem:[%s2 + $0x124] sm:$0xf]
  %v108 = vld [vmem:[%s2 + $0x128] sm:$0xf]
  %v109 = vld [vmem:[%s2 + $0x12c] sm:$0xf]
  %v110 = vld [vmem:[%s2 + $0x130] sm:$0xf]
  %v111 = vld [vmem:[%s2 + $0x134] sm:$0xf]
  %v112 = vld [vmem:[%s2 + $0x138] sm:$0xf]
  %v113 = vld [vmem:[%s2 + $0x13c] sm:$0xf]
  %v114 = vld [vmem:[%s2 + $0x140] sm:$0xf]
  %v115 = vld [vmem:[%s2 + $0x144] sm:$0xf]
  %v116 = vld [vmem:[%s2 + $0x148] sm:$0xf]
  %v117 = vld [vmem:[%s2 + $0x14c] sm:$0xf]
  %v118 = vld [vmem:[%s2 + $0x150] sm:$0xf]
  %v119 = vld [vmem:[%s2 + $0x154] sm:$0xf]
  %v120 = vld [vmem:[%s2 + $0x158] sm:$0xf]
  %v121 = vld [vmem:[%s2 + $0x15c] sm:$0xf]
  %v122 = vld [vmem:[%s2 + $0x160] sm:$0xf]
  %v123 = vld [vmem:[%s2 + $0x164] sm:$0xf]
  %v124 = vld [vmem:[%s2 + $0x168] sm:$0xf]
  %v125 = vld [vmem:[%s2 + $0x16c] sm:$0xf]
  %v126 = vld [vmem:[%s2 + $0x170] sm:$0xf]
  %v127 = vld [vmem:[%s2 + $0x174] sm:$0xf]
  %v128 = vld [vmem:[%s2 + $0x178] sm:$0xf]
  %v129 = vld [vmem:[%s2 + $0x17c] sm:$0xf]
  %v130 = vld [vmem:[%s3] sm:$0x1]
  %132 = vst [vmem:[#allocation1] ss:$9 sm:$0xff] %v33
  %v133 = vld [vmem:[#allocation1] sm:$0xff]
  %v134 = vld [vmem:[#allocation1 + $0x9] sm:$0xff]
  %v135 = vld [vmem:[#allocation1 + $0x12] sm:$0xff]
  %v136 = vld [vmem:[#allocation1 + $0x1b] sm:$0xff]
  %v137 = vld [vmem:[#allocation1 + $0x24] sm:$0xff]
  %v138 = vld [vmem:[#allocation1 + $0x2d] sm:$0xff]
  %v241 = vunpack.c.l.b16 %v34
  %v242 = vunpack.c.l.b16 %v35
  %v243 = vunpack.c.l.b16 %v36
  %v244 = vunpack.c.l.b16 %v37
  %v245 = vunpack.c.l.b16 %v38
  %v246 = vunpack.c.l.b16 %v39
  %v247 = vunpack.c.l.b16 %v40
  %v248 = vunpack.c.l.b16 %v41
  %v249 = vunpack.c.l.b16 %v42
  %v250 = vunpack.c.l.b16 %v43
  %v251 = vunpack.c.l.b16 %v44
  %v252 = vunpack.c.l.b16 %v45
  %v253 = vunpack.c.l.b16 %v46
  %v254 = vunpack.c.l.b16 %v47
  %v255 = vunpack.c.l.b16 %v48
  %v256 = vunpack.c.l.b16 %v49
  %v257 = vunpack.c.l.b16 %v50
  %v258 = vunpack.c.l.b16 %v51
  %v259 = vunpack.c.l.b16 %v52
  %v260 = vunpack.c.l.b16 %v53
  %v261 = vunpack.c.l.b16 %v54
  %v262 = vunpack.c.l.b16 %v55
  %v263 = vunpack.c.l.b16 %v56
  %v264 = vunpack.c.l.b16 %v57
  %v265 = vunpack.c.l.b16 %v58
  %v266 = vunpack.c.l.b16 %v59
  %v267 = vunpack.c.l.b16 %v60
  %v268 = vunpack.c.l.b16 %v61
  %v269 = vunpack.c.l.b16 %v62
  %v270 = vunpack.c.l.b16 %v63
  %v271 = vunpack.c.l.b16 %v64
  %v272 = vunpack.c.l.b16 %v65
  %v273 = vunpack.c.l.b16 %v66
  %v274 = vunpack.c.l.b16 %v67
  %v275 = vunpack.c.l.b16 %v68
  %v276 = vunpack.c.l.b16 %v69
  %v277 = vunpack.c.l.b16 %v70
  %v278 = vunpack.c.l.b16 %v71
  %v279 = vunpack.c.l.b16 %v72
  %v280 = vunpack.c.l.b16 %v73
  %v281 = vunpack.c.l.b16 %v74
  %v282 = vunpack.c.l.b16 %v75
  %v283 = vunpack.c.l.b16 %v76
  %v284 = vunpack.c.l.b16 %v77
  %v285 = vunpack.c.l.b16 %v78
  %v286 = vunpack.c.l.b16 %v79
  %v287 = vunpack.c.l.b16 %v80
  %v288 = vunpack.c.l.b16 %v81
  %v289 = vunpack.c.l.b16 %v82
  %v290 = vunpack.c.l.b16 %v83
  %v291 = vunpack.c.l.b16 %v84
  %v292 = vunpack.c.l.b16 %v85
  %v293 = vunpack.c.l.b16 %v86
  %v294 = vunpack.c.l.b16 %v87
  %v295 = vunpack.c.l.b16 %v88
  %v296 = vunpack.c.l.b16 %v89
  %v297 = vunpack.c.l.b16 %v90
  %v298 = vunpack.c.l.b16 %v91
  %v299 = vunpack.c.l.b16 %v92
  %v300 = vunpack.c.l.b16 %v93
  %v301 = vunpack.c.l.b16 %v94
  %v302 = vunpack.c.l.b16 %v95
  %v303 = vunpack.c.l.b16 %v96
  %v304 = vunpack.c.l.b16 %v97
  %v305 = vunpack.c.l.b16 %v98
  %v306 = vunpack.c.l.b16 %v99
  %v307 = vunpack.c.l.b16 %v100
  %v308 = vunpack.c.l.b16 %v101
  %v309 = vunpack.c.l.b16 %v102
  %v310 = vunpack.c.l.b16 %v103
  %v311 = vunpack.c.l.b16 %v104
  %v312 = vunpack.c.l.b16 %v105
  %v313 = vunpack.c.l.b16 %v106
  %v314 = vunpack.c.l.b16 %v107
  %v315 = vunpack.c.l.b16 %v108
  %v316 = vunpack.c.l.b16 %v109
  %v317 = vunpack.c.l.b16 %v110
  %v318 = vunpack.c.l.b16 %v111
  %v319 = vunpack.c.l.b16 %v112
  %v320 = vunpack.c.l.b16 %v113
  %v321 = vunpack.c.l.b16 %v114
  %v322 = vunpack.c.l.b16 %v115
  %v323 = vunpack.c.l.b16 %v116
  %v324 = vunpack.c.l.b16 %v117
  %v325 = vunpack.c.l.b16 %v118
  %v326 = vunpack.c.l.b16 %v119
  %v327 = vunpack.c.l.b16 %v120
  %v328 = vunpack.c.l.b16 %v121
  %v329 = vunpack.c.l.b16 %v122
  %v330 = vunpack.c.l.b16 %v123
  %v331 = vunpack.c.l.b16 %v124
  %v332 = vunpack.c.l.b16 %v125
  %v333 = vunpack.c.l.b16 %v126
  %v334 = vunpack.c.l.b16 %v127
  %v335 = vunpack.c.l.b16 %v128
  %v336 = vunpack.c.l.b16 %v129
  %v337 = vpack.c.b16 %v242, %v241
  %v338 = vpack.c.b16 %v244, %v243
  %v339 = vpack.c.b16 %v246, %v245
  %v340 = vpack.c.b16 %v248, %v247
  %v341 = vpack.c.b16 %v250, %v249
  %v342 = vpack.c.b16 %v252, %v251
  %v343 = vpack.c.b16 %v254, %v253
  %v344 = vpack.c.b16 %v256, %v255
  %v345 = vpack.c.b16 %v258, %v257
  %v346 = vpack.c.b16 %v260, %v259
  %v347 = vpack.c.b16 %v262, %v261
  %v348 = vpack.c.b16 %v264, %v263
  %v349 = vpack.c.b16 %v266, %v265
  %v350 = vpack.c.b16 %v268, %v267
  %v351 = vpack.c.b16 %v270, %v269
  %v352 = vpack.c.b16 %v272, %v271
  %v353 = vpack.c.b16 %v274, %v273
  %v354 = vpack.c.b16 %v276, %v275
  %v355 = vpack.c.b16 %v278, %v277
  %v356 = vpack.c.b16 %v280, %v279
  %v357 = vpack.c.b16 %v282, %v281
  %v358 = vpack.c.b16 %v284, %v283
  %v359 = vpack.c.b16 %v286, %v285
  %v360 = vpack.c.b16 %v288, %v287
  %v361 = vpack.c.b16 %v290, %v289
  %v362 = vpack.c.b16 %v292, %v291
  %v363 = vpack.c.b16 %v294, %v293
  %v364 = vpack.c.b16 %v296, %v295
  %v365 = vpack.c.b16 %v298, %v297
  %v366 = vpack.c.b16 %v300, %v299
  %v367 = vpack.c.b16 %v302, %v301
  %v368 = vpack.c.b16 %v304, %v303
  %v369 = vpack.c.b16 %v306, %v305
  %v370 = vpack.c.b16 %v308, %v307
  %v371 = vpack.c.b16 %v310, %v309
  %v372 = vpack.c.b16 %v312, %v311
  %v373 = vpack.c.b16 %v314, %v313
  %v374 = vpack.c.b16 %v316, %v315
  %v375 = vpack.c.b16 %v318, %v317
  %v376 = vpack.c.b16 %v320, %v319
  %v377 = vpack.c.b16 %v322, %v321
  %v378 = vpack.c.b16 %v324, %v323
  %v379 = vpack.c.b16 %v326, %v325
  %v380 = vpack.c.b16 %v328, %v327
  %v381 = vpack.c.b16 %v330, %v329
  %v382 = vpack.c.b16 %v332, %v331
  %v383 = vpack.c.b16 %v334, %v333
  %v384 = vpack.c.b16 %v336, %v335
  %433 = vmatpush.bf16.msra.mxu0 %v344
  %434 = vmatpush.bf16.msra.mxu0 %v343
  %435 = vmatpush.bf16.msra.mxu0 %v342
  %436 = vmatpush.bf16.msra.mxu0 %v341
  %437 = vmatpush.bf16.msra.mxu0 %v340
  %438 = vmatpush.bf16.msra.mxu0 %v339
  %439 = vmatpush.bf16.msra.mxu0 %v338
  %440 = vmatpush.bf16.msra.mxu0 %v337
  %441 = vmatmul.bf16.gmra.mxu0 %v133
  %v442 = vpop.f32.mrf.mxu0
  %v443 = vadd.f32 %v130, %v442
  %v444 = vpop.f32.mrf.mxu0
  %445 = vdwg.mxu0
  %446 = vmatpush.bf16.msra.mxu0 %v352
  %447 = vmatpush.bf16.msra.mxu0 %v351
  %448 = vmatpush.bf16.msra.mxu0 %v350
  %449 = vmatpush.bf16.msra.mxu0 %v349
  %450 = vmatpush.bf16.msra.mxu0 %v348
  %451 = vmatpush.bf16.msra.mxu0 %v347
  %452 = vmatpush.bf16.msra.mxu0 %v346
  %453 = vmatpush.bf16.msra.mxu0 %v345
  %454 = vmatmul.bf16.gmra.mxu0 %v134
  %v455 = vpop.f32.mrf.mxu0
  %v456 = vadd.f32 %v443, %v455
  %v457 = vpop.f32.mrf.mxu0
  %458 = vdwg.mxu0
  %459 = vmatpush.bf16.msra.mxu0 %v360
  %460 = vmatpush.bf16.msra.mxu0 %v359
  %461 = vmatpush.bf16.msra.mxu0 %v358
  %462 = vmatpush.bf16.msra.mxu0 %v357
  %463 = vmatpush.bf16.msra.mxu0 %v356
  %464 = vmatpush.bf16.msra.mxu0 %v355
  %465 = vmatpush.bf16.msra.mxu0 %v354
  %466 = vmatpush.bf16.msra.mxu0 %v353
  %467 = vmatmul.bf16.gmra.mxu0 %v135
  %v468 = vpop.f32.mrf.mxu0
  %v469 = vadd.f32 %v456, %v468
  %v470 = vpop.f32.mrf.mxu0
  %471 = vdwg.mxu0
  %472 = vmatpush.bf16.msra.mxu0 %v368
  %473 = vmatpush.bf16.msra.mxu0 %v367
  %474 = vmatpush.bf16.msra.mxu0 %v366
  %475 = vmatpush.bf16.msra.mxu0 %v365
  %476 = vmatpush.bf16.msra.mxu0 %v364
  %477 = vmatpush.bf16.msra.mxu0 %v363
  %478 = vmatpush.bf16.msra.mxu0 %v362
  %479 = vmatpush.bf16.msra.mxu0 %v361
  %480 = vmatmul.bf16.gmra.mxu0 %v136
  %v481 = vpop.f32.mrf.mxu0
  %v482 = vadd.f32 %v469, %v481
  %v483 = vpop.f32.mrf.mxu0
  %484 = vdwg.mxu0
  %485 = vmatpush.bf16.msra.mxu0 %v376
  %486 = vmatpush.bf16.msra.mxu0 %v375
  %487 = vmatpush.bf16.msra.mxu0 %v374
  %488 = vmatpush.bf16.msra.mxu0 %v373
  %489 = vmatpush.bf16.msra.mxu0 %v372
  %490 = vmatpush.bf16.msra.mxu0 %v371
  %491 = vmatpush.bf16.msra.mxu0 %v370
  %492 = vmatpush.bf16.msra.mxu0 %v369
  %493 = vmatmul.bf16.gmra.mxu0 %v137
  %v494 = vpop.f32.mrf.mxu0
  %v495 = vadd.f32 %v482, %v494
  %v496 = vpop.f32.mrf.mxu0
  %497 = vdwg.mxu0
  %498 = vmatpush.bf16.msra.mxu0 %v384
  %499 = vmatpush.bf16.msra.mxu0 %v383
  %500 = vmatpush.bf16.msra.mxu0 %v382
  %501 = vmatpush.bf16.msra.mxu0 %v381
  %502 = vmatpush.bf16.msra.mxu0 %v380
  %503 = vmatpush.bf16.msra.mxu0 %v379
  %504 = vmatpush.bf16.msra.mxu0 %v378
  %505 = vmatpush.bf16.msra.mxu0 %v377
  %506 = vmatmul.bf16.gmra.mxu0 %v138
  %v507 = vpop.f32.mrf.mxu0
  %v508 = vadd.f32 %v495, %v507
  %v509 = vpop.f32.mrf.mxu0
  %510 = vdwg.mxu0
  %vm511 = vcmask 1040384
  %v512 = vsel %vm511, %v508, -inf
  %513 = vmax.xlane.f32.xlu0 %v512
  %v514 = vpop.xlane.xlu0 %513
  %v515 = vsub.f32 %v508, %v514
  %v516 = vmul.f32 %v515, 1.442695
  %v517 = vpow.pop %v516
  %v518 = vsel %vm511, %v517, 0.0
  %519 = vadd.xlane.f32.xlu0 %v518
  %v520 = vpop.xlane.xlu0 %519
  %v521 = vrcp.pop %v520
  %v522 = vmul.f32 %v517, %v521
  %v523 = vperm.slane %v522, 0
  %524 = vst [vmem:[%s4] sm:$0xff] %v523
  // Predicated region
  $region14: #{custom_model_forward.1} parent=0 // pred_check
    _
  $region15: #{custom_model_forward.1} parent=0 // pred_check_branch
    %526 = sbr.rel (0) target = $region17
  $region16: #{custom_model_forward.1} parent=0 // pred_region
    _
  $region17: #{custom_model_forward.1} parent=0 // pred_fallthru
    _
  // Predicated region
  $region18: #{custom_model_forward.1} parent=0 // pred_check
    _
  $region19: #{custom_model_forward.1} parent=0 // pred_check_branch
    %528 = sbr.rel (0) target = $region21
  $region20: #{custom_model_forward.1} parent=0 // pred_region
    _
  $region21: #{custom_model_forward.1} parent=0 // pred_fallthru
    _

</llo_original>
